<compile_context>
chip_gen: v5e
topology: v5e:2x2
jax: 0.10.0
libtpu: 0.0.40
codegen_flags: <defaults>
</compile_context>

<pallas_src>
import functools

import jax
import jax.numpy as jnp
from jax import lax
from jax.experimental import pallas as pl
from jax.experimental.pallas import tpu as pltpu


def _round_up(x, m):
    return (x + m - 1) // m * m


def _cdiv(a, b):
    return (a + b - 1) // b


def _contrastive_loss_kernel(tau_ref, q_ref, cand_ref, bias_ref, out_ref,
                             qs_sc, t_sc, m_sc, l_sc, *,
                             needs_mask, matmul_dtype):
    # tau_ref  : SMEM (1,)     learned temperature parameter (pre-exp)
    # q_ref    : VMEM (TM, E)  query row tile (stream dtype == matmul dtype)
    # cand_ref : VMEM (TK, E)  candidate class tile (positives ++ negatives)
    # bias_ref : VMEM (1, TK)  additive mask (0 valid / -1e30 padded columns)
    # out_ref  : VMEM (TM, 1)  per-row (lse - target); written at the last k
    # qs_sc    : VMEM (TM, E)  hoisted temperature-scaled LHS (matmul dtype)
    # t_sc     : VMEM (TM, 1)  target logit  <q_i, pos_i> / exp(tau)
    # m_sc,l_sc: VMEM (TM, 1)  online-softmax running max / running sum
    k = pl.program_id(1)
    num_k = pl.num_programs(1)

    @pl.when(k == 0)
    def _init():
        inv_temp = jnp.exp(-tau_ref[0])                    # 1 / exp(tau)
        q32 = q_ref[...].astype(jnp.float32)
        qs_mm = (q32 * inv_temp).astype(qs_sc.dtype)       # fold temp once
        qs_sc[...] = qs_mm
        # Target logit through the SAME rounded operands the MXU sees for the
        # positive column (row i's label column is its own embedding), so the
        # numerator / denominator stay consistent on the bf16 path.
        t_sc[...] = jnp.sum(qs_mm.astype(jnp.float32) * q32,
                            axis=-1, keepdims=True)
        m_sc[...] = jnp.full_like(m_sc, -1e30)
        l_sc[...] = jnp.zeros_like(l_sc)

    # f32 operands need HIGHEST so the MXU's multi-pass decomposition matches
    # f32 numerics; bf16 operands take the native fast path (f32 accumulation).
    if jnp.dtype(matmul_dtype) == jnp.dtype(jnp.float32):
        prec = lax.Precision.HIGHEST
    else:
        prec = None

    # Contract the embedding axis of both operands -> the candidate tile is
    # consumed in its natural [rows, E] layout (no transpose / relayout), and
    # the hoisted LHS needs no per-step scaling or cast.
    logits = lax.dot_general(
        qs_sc[...], cand_ref[...],
        dimension_numbers=(((1,), (1,)), ((), ())),
        preferred_element_type=jnp.float32,
        precision=prec)                                    # (TM, TK)
    if needs_mask:
        logits = logits + bias_ref[...]                    # padded cols -> -1e30

    # Online log-sum-exp update.
    m_prev = m_sc[...]
    m_new = jnp.maximum(m_prev, jnp.max(logits, axis=-1, keepdims=True))
    alpha = jnp.exp(m_prev - m_new)
    l_sc[...] = alpha * l_sc[...] + jnp.sum(jnp.exp(logits - m_new),
                                            axis=-1, keepdims=True)
    m_sc[...] = m_new

    @pl.when(k == num_k - 1)
    def _finalize():
        lse = m_sc[...] + jnp.log(l_sc[...])               # (TM, 1)
        out_ref[...] = lse - t_sc[...]                     # tiny (TM,1) store


@functools.partial(jax.jit,
                   static_argnames=("row_tile", "class_tile", "matmul_dtype"))
def contrastive_loss(positive_embeddings, negative_embeddings, tau, *,
                     row_tile=None, class_tile=None,
                     matmul_dtype=jnp.bfloat16):
    """Pallas TPU implementation of ContrastiveLoss.forward.

    positive_embeddings: (B, E)    queries (= positive candidates)
    negative_embeddings: (B*N, E)  negative candidates
    tau: scalar float32; similarities are divided by exp(tau)
    matmul_dtype: jnp.bfloat16 (fast MXU path, f32 accumulation — default) or
                  jnp.float32 (exact path, Precision.HIGHEST).
    Returns: scalar float32 loss (mean cross-entropy, labels = arange(B)).
    """
    pos = positive_embeddings.astype(jnp.float32)
    neg = negative_embeddings.astype(jnp.float32)
    B, E = pos.shape
    NN = neg.shape[0]
    C = B + NN                                  # total candidate columns

    stream_dtype = jnp.dtype(matmul_dtype)      # stream operands in MXU dtype

    # ---- tile selection ------------------------------------------------------
    if row_tile is None:
        TM = min(256, _round_up(B, 8))
        # v7x megacore: keep >= 2 row tiles when B allows so both TensorCores
        # get work on the "parallel" row axis (no effect on v5e/v6e: 1 TC).
        if B > 8 and _cdiv(B, TM) < 2:
            TM = _round_up(_cdiv(B, 2), 8)
    else:
        TM = row_tile
    TM = max(8, _round_up(TM, 8))

    if class_tile is None:
        TK = min(512, _round_up(C, 128))
    else:
        TK = class_tile
    # Lane-aligned class tiles: multiples of 128 keep the (TM, TK) logits tile
    # and the (1, TK) bias block unmasked on 128-lane vregs / the v5e MXU.
    TK = max(128, _round_up(TK, 128))

    B_pad = _round_up(B, TM)
    C_pad = _round_up(C, TK)
    needs_mask = C_pad != C
    R = B_pad // TM
    K = C_pad // TK

    # ---- inputs --------------------------------------------------------------
    q_in = pos
    if B_pad != B:            # padded query rows are sliced off before the mean
        q_in = jnp.concatenate(
            [q_in, jnp.zeros((B_pad - B, E), jnp.float32)], axis=0)
    q_in = q_in.astype(stream_dtype)

    # Single wrapper concatenate: positives occupy the first B candidate
    # columns (row i's label column is its own embedding).  Padded rows are
    # zeros and get masked to -1e30 by the additive bias.
    cand = jnp.concatenate([pos, neg], axis=0)
    if needs_mask:
        cand = jnp.concatenate(
            [cand, jnp.zeros((C_pad - C, E), jnp.float32)], axis=0)
    cand = cand.astype(stream_dtype)

    col = jnp.arange(C_pad, dtype=jnp.int32)[None, :]
    bias = jnp.where(col < C, 0.0, -1e30).astype(jnp.float32)   # (1, C_pad)

    tau_arr = jnp.reshape(jnp.asarray(tau, dtype=jnp.float32), (1,))

    # ---- VMEM budget / cost (derived from the actual working set) -----------
    item = stream_dtype.itemsize
    vmem_need = (
        2 * TM * E * item          # query row tile (double-buffered)
        + 2 * TK * E * item        # candidate tile (double-buffered)
        + 2 * TK * 4               # padding-bias tile (double-buffered)
        + 2 * TM * 4               # per-row output tile (double-buffered)
        + TM * E * item            # hoisted scaled-LHS scratch
        + 3 * TM * 4               # target / running-max / running-sum scratch
        + 4 * TM * TK * 4          # (TM, TK) logits / exp temporaries headroom
    )
    # Clamp to [32 MiB, 64 MiB]: lets large tiles breathe on v5e/v6e (128 MiB
    # physical VMEM) while never exceeding v7x's 64 MiB physical ceiling.
    vmem_limit = int(min(max(2 * vmem_need, 32 * 1024 * 1024),
                         64 * 1024 * 1024))

    cost = pl.CostEstimate(
        flops=2 * B_pad * C_pad * E,
        transcendentals=B_pad * C_pad,
        # Candidates (and bias) are re-streamed once per row tile.
        bytes_accessed=int(B_pad * E * item
                           + R * (C_pad * E * item + C_pad * 4)
                           + B_pad * 4))

    kernel = functools.partial(_contrastive_loss_kernel,
                               needs_mask=needs_mask,
                               matmul_dtype=stream_dtype)

    grid_spec = pltpu.PrefetchScalarGridSpec(
        num_scalar_prefetch=0,
        grid=(R, K),
        in_specs=[
            pl.BlockSpec(memory_space=pltpu.MemorySpace.SMEM),   # tau (scalar)
            pl.BlockSpec((TM, E), lambda r, k: (r, 0)),          # query rows
            pl.BlockSpec((TK, E), lambda r, k: (k, 0)),          # candidate tile
            pl.BlockSpec((1, TK), lambda r, k: (0, k)),          # padding bias
        ],
        out_specs=pl.BlockSpec((TM, 1), lambda r, k: (r, 0)),    # per-row loss
        scratch_shapes=[
            pltpu.VMEM((TM, E), stream_dtype),    # hoisted scaled LHS
            pltpu.VMEM((TM, 1), jnp.float32),     # target logit
            pltpu.VMEM((TM, 1), jnp.float32),     # running max
            pltpu.VMEM((TM, 1), jnp.float32),     # running sum
        ],
    )

    per_row = pl.pallas_call(
        kernel,
        out_shape=jax.ShapeDtypeStruct((B_pad, 1), jnp.float32),
        grid_spec=grid_spec,
        compiler_params=pltpu.CompilerParams(
            # Row tiles split across TensorCores (v7x megacore); the class
            # (reduction) axis carries the online-LSE state -> arbitrary.
            dimension_semantics=("parallel", "arbitrary"),
            vmem_limit_bytes=vmem_limit),
        cost_estimate=cost,
    )(tau_arr, q_in, cand, bias)

    # F.cross_entropy default reduction='mean' over the B real rows.
    return jnp.sum(per_row[:B, 0]) / B


def _reference_loss(pos, neg, tau):
    """Pure-JAX reference mirroring the PyTorch module."""
    B = pos.shape[0]
    all_emb = jnp.concatenate([pos, neg], axis=0)
    logits = jnp.dot(pos, all_emb.T,
                     precision=jax.lax.Precision.HIGHEST) / jnp.exp(tau)
    log_probs = jax.nn.log_softmax(logits, axis=-1)
    return -jnp.mean(log_probs[jnp.arange(B), jnp.arange(B)])


if __name__ == "__main__":
    key = jax.random.PRNGKey(0)
    B, E, N = 16, 64, 12   # batch, embedding_dim, negatives per positive

    k_pos, k_neg = jax.random.split(key)
    positive_embeddings = jax.random.normal(k_pos, (B, E), dtype=jnp.float32)
    negative_embeddings = jax.random.normal(k_neg, (B * N, E), dtype=jnp.float32)
    # L2-normalize so the loss is O(1) and the numerical check is meaningful.
    positive_embeddings = positive_embeddings / jnp.linalg.norm(
        positive_embeddings, axis=-1, keepdims=True)
    negative_embeddings = negative_embeddings / jnp.linalg.norm(
        negative_embeddings, axis=-1, keepdims=True)

    # Deterministic parameter init, matching nn.Parameter(torch.tensor(1.0)).
    tau = jnp.float32(1.0)

    ref = _reference_loss(positive_embeddings, negative_embeddings, tau)

    # Exact path: f32 matmuls (HIGHEST).  row_tile=8 -> 2 row tiles,
    # class_tile=128 over C=208 candidates -> 2 class steps with the last one
    # partially padded (exercises the online LSE + additive-bias mask paths).
    loss_f32 = contrastive_loss(positive_embeddings, negative_embeddings, tau,
                                row_tile=8, class_tile=128,
                                matmul_dtype=jnp.float32)
    loss_f32 = jax.block_until_ready(loss_f32)
    assert jnp.allclose(loss_f32, ref, atol=1e-4, rtol=1e-4), (loss_f32, ref)

    # Default fast path: bf16-streamed operands, bf16 MXU matmuls, f32 accum.
    loss_bf16 = contrastive_loss(positive_embeddings, negative_embeddings, tau)
    loss_bf16 = jax.block_until_ready(loss_bf16)
    assert jnp.allclose(loss_bf16, ref, atol=2e-2, rtol=2e-2), (loss_bf16, ref)

    print("KERNEL_OK")
</pallas_src>

<mosaic_0001>
module attributes {stable_mosaic.version = 11 : i64} {
  func.func @_contrastive_loss_kernel(%arg0: i32, %arg1: i32, %arg2: memref<1xf32, #tpu.memory_space<smem>>, %arg3: memref<8x64xf32, #tpu.memory_space<vmem>>, %arg4: memref<128x64xf32, #tpu.memory_space<vmem>>, %arg5: memref<1x128xf32, #tpu.memory_space<vmem>>, %arg6: memref<8x1xf32, #tpu.memory_space<vmem>>, %arg7: memref<8x64xf32, #tpu.memory_space<vmem>>, %arg8: memref<8x1xf32, #tpu.memory_space<vmem>>, %arg9: memref<8x1xf32, #tpu.memory_space<vmem>>, %arg10: memref<8x1xf32, #tpu.memory_space<vmem>>) attributes {dimension_semantics = [#tpu.dimension_semantics<parallel>, #tpu.dimension_semantics<arbitrary>], iteration_bounds = array<i64: 2, 2>, scalar_prefetch = 0 : i64, scratch_operands = 4 : i64, tpu.core_type = #tpu.core_type<tc>, window_params = [{transform_indices = @transform_0, window_bounds = array<i64: 1>}, {transform_indices = @transform_1, window_bounds = array<i64: 8, 64>}, {transform_indices = @transform_2, window_bounds = array<i64: 128, 64>}, {transform_indices = @transform_3, window_bounds = array<i64: 1, 128>}, {transform_indices = @transform_4, window_bounds = array<i64: 8, 1>}]} {
    %c0_i32 = arith.constant 0 : i32
    %0 = arith.cmpi eq, %arg1, %c0_i32 : i32
    %1 = arith.extui %0 : i1 to i32
    %c0_i32_0 = arith.constant 0 : i32
    %2 = arith.cmpi ne, %1, %c0_i32_0 : i32
    scf.if %2 {
      %c0_17 = arith.constant 0 : index
      %28 = memref.load %arg2[%c0_17] : memref<1xf32, #tpu.memory_space<smem>>
      %cst_18 = arith.constant 0.000000e+00 : f32
      %29 = arith.subf %cst_18, %28 : f32
      %30 = math.exp %29 : f32
      %c0_19 = arith.constant 0 : index
      %c0_20 = arith.constant 0 : index
      %31 = vector.load %arg3[%c0_19, %c0_20] : memref<8x64xf32, #tpu.memory_space<vmem>>, vector<8x64xf32>
      %32 = vector.broadcast %30 : f32 to vector<8x64xf32>
      %33 = arith.mulf %31, %32 : vector<8x64xf32>
      %c0_21 = arith.constant 0 : index
      %c0_22 = arith.constant 0 : index
      %34 = vector.load %arg7[%c0_21, %c0_22] : memref<8x64xf32, #tpu.memory_space<vmem>>, vector<8x64xf32>
      tpu.vector_store %arg7[%c0_21, %c0_22], %33 {strides = array<i32>} : memref<8x64xf32, #tpu.memory_space<vmem>>, vector<8x64xf32>,
      %35 = arith.mulf %33, %31 : vector<8x64xf32>
      %cst_23 = arith.constant dense<0.000000e+00> : vector<8xf32>
      %36 = vector.multi_reduction <add>, %35, %cst_23 [1] : vector<8x64xf32> to vector<8xf32>
      %37 = vector.shape_cast %36 : vector<8xf32> to vector<8x1xf32>
      %c0_24 = arith.constant 0 : index
      %c0_25 = arith.constant 0 : index
      %38 = vector.load %arg8[%c0_24, %c0_25] : memref<8x1xf32, #tpu.memory_space<vmem>>, vector<8x1xf32>
      tpu.vector_store %arg8[%c0_24, %c0_25], %37 {strides = array<i32>} : memref<8x1xf32, #tpu.memory_space<vmem>>, vector<8x1xf32>,
      %cst_26 = arith.constant -1.000000e+30 : f32
      %39 = vector.broadcast %cst_26 : f32 to vector<8x1xf32>
      %c0_27 = arith.constant 0 : index
      %c0_28 = arith.constant 0 : index
      %40 = vector.load %arg9[%c0_27, %c0_28] : memref<8x1xf32, #tpu.memory_space<vmem>>, vector<8x1xf32>
      tpu.vector_store %arg9[%c0_27, %c0_28], %39 {strides = array<i32>} : memref<8x1xf32, #tpu.memory_space<vmem>>, vector<8x1xf32>,
      %cst_29 = arith.constant 0.000000e+00 : f32
      %41 = vector.broadcast %cst_29 : f32 to vector<8x1xf32>
      %c0_30 = arith.constant 0 : index
      %c0_31 = arith.constant 0 : index
      %42 = vector.load %arg10[%c0_30, %c0_31] : memref<8x1xf32, #tpu.memory_space<vmem>>, vector<8x1xf32>
      tpu.vector_store %arg10[%c0_30, %c0_31], %41 {strides = array<i32>} : memref<8x1xf32, #tpu.memory_space<vmem>>, vector<8x1xf32>,
    } else {
    }
    %c0 = arith.constant 0 : index
    %c0_1 = arith.constant 0 : index
    %3 = vector.load %arg7[%c0, %c0_1] : memref<8x64xf32, #tpu.memory_space<vmem>>, vector<8x64xf32>
    %c0_2 = arith.constant 0 : index
    %c0_3 = arith.constant 0 : index
    %4 = vector.load %arg4[%c0_2, %c0_3] : memref<128x64xf32, #tpu.memory_space<vmem>>, vector<128x64xf32>
    %cst = arith.constant dense<0.000000e+00> : vector<8x128xf32>
    %5 = tpu.matmul %3, %4, %cst {dimension_numbers = #tpu.dot_dimension_numbers<[1], [1], [0], [0], [0, 0, 1, 0], [], []>, precision = #tpu.contract_precision<fp32>} : vector<8x64xf32>, vector<128x64xf32>, vector<8x128xf32> -> vector<8x128xf32>
    %c0_4 = arith.constant 0 : index
    %c0_5 = arith.constant 0 : index
    %6 = vector.load %arg5[%c0_4, %c0_5] : memref<1x128xf32, #tpu.memory_space<vmem>>, vector<1x128xf32>
    %7 = vector.broadcast %6 : vector<1x128xf32> to vector<8x128xf32>
    %8 = arith.addf %5, %7 : vector<8x128xf32>
    %c0_6 = arith.constant 0 : index
    %c0_7 = arith.constant 0 : index
    %9 = vector.load %arg9[%c0_6, %c0_7] : memref<8x1xf32, #tpu.memory_space<vmem>>, vector<8x1xf32>
    %cst_8 = arith.constant dense<0xFF800000> : vector<8xf32>
    %10 = vector.multi_reduction <maximumf>, %8, %cst_8 [1] : vector<8x128xf32> to vector<8xf32>
    %11 = vector.shape_cast %10 : vector<8xf32> to vector<8x1xf32>
    %12 = arith.maximumf %9, %11 : vector<8x1xf32>
    %13 = arith.subf %9, %12 : vector<8x1xf32>
    %14 = math.exp %13 : vector<8x1xf32>
    %c0_9 = arith.constant 0 : index
    %c0_10 = arith.constant 0 : index
    %15 = vector.load %arg10[%c0_9, %c0_10] : memref<8x1xf32, #tpu.memory_space<vmem>>, vector<8x1xf32>
    %16 = arith.mulf %14, %15 : vector<8x1xf32>
    %17 = vector.broadcast %12 : vector<8x1xf32> to vector<8x128xf32>
    %18 = arith.subf %8, %17 : vector<8x128xf32>
    %19 = math.exp %18 : vector<8x128xf32>
    %cst_11 = arith.constant dense<0.000000e+00> : vector<8xf32>
    %20 = vector.multi_reduction <add>, %19, %cst_11 [1] : vector<8x128xf32> to vector<8xf32>
    %21 = vector.shape_cast %20 : vector<8xf32> to vector<8x1xf32>
    %22 = arith.addf %16, %21 : vector<8x1xf32>
    %c0_12 = arith.constant 0 : index
    %c0_13 = arith.constant 0 : index
    %23 = vector.load %arg10[%c0_12, %c0_13] : memref<8x1xf32, #tpu.memory_space<vmem>>, vector<8x1xf32>
    tpu.vector_store %arg10[%c0_12, %c0_13], %22 {strides = array<i32>} : memref<8x1xf32, #tpu.memory_space<vmem>>, vector<8x1xf32>,
    %c0_14 = arith.constant 0 : index
    %c0_15 = arith.constant 0 : index
    %24 = vector.load %arg9[%c0_14, %c0_15] : memref<8x1xf32, #tpu.memory_space<vmem>>, vector<8x1xf32>
    tpu.vector_store %arg9[%c0_14, %c0_15], %12 {strides = array<i32>} : memref<8x1xf32, #tpu.memory_space<vmem>>, vector<8x1xf32>,
    %c1_i32 = arith.constant 1 : i32
    %25 = arith.cmpi eq, %arg1, %c1_i32 : i32
    %26 = arith.extui %25 : i1 to i32
    %c0_i32_16 = arith.constant 0 : i32
    %27 = arith.cmpi ne, %26, %c0_i32_16 : i32
    scf.if %27 {
      %c0_17 = arith.constant 0 : index
      %c0_18 = arith.constant 0 : index
      %28 = vector.load %arg9[%c0_17, %c0_18] : memref<8x1xf32, #tpu.memory_space<vmem>>, vector<8x1xf32>
      %c0_19 = arith.constant 0 : index
      %c0_20 = arith.constant 0 : index
      %29 = vector.load %arg10[%c0_19, %c0_20] : memref<8x1xf32, #tpu.memory_space<vmem>>, vector<8x1xf32>
      %30 = math.log %29 : vector<8x1xf32>
      %31 = arith.addf %28, %30 : vector<8x1xf32>
      %c0_21 = arith.constant 0 : index
      %c0_22 = arith.constant 0 : index
      %32 = vector.load %arg8[%c0_21, %c0_22] : memref<8x1xf32, #tpu.memory_space<vmem>>, vector<8x1xf32>
      %33 = arith.subf %31, %32 : vector<8x1xf32>
      %c0_23 = arith.constant 0 : index
      %c0_24 = arith.constant 0 : index
      %34 = vector.load %arg6[%c0_23, %c0_24] : memref<8x1xf32, #tpu.memory_space<vmem>>, vector<8x1xf32>
      tpu.vector_store %arg6[%c0_23, %c0_24], %33 {strides = array<i32>} : memref<8x1xf32, #tpu.memory_space<vmem>>, vector<8x1xf32>,
    } else {
    }
    return
  }
  func.func @transform_0(%arg0: i32, %arg1: i32) -> i32 {
    %c0_i32 = arith.constant 0 : i32
    %c0_i32_0 = arith.constant 0 : i32
    return %c0_i32 : i32
  }
  func.func @transform_1(%arg0: i32, %arg1: i32) -> (i32, i32) {
    %c0_i32 = arith.constant 0 : i32
    %c0_i32_0 = arith.constant 0 : i32
    return %arg0, %c0_i32 : i32, i32
  }
  func.func @transform_2(%arg0: i32, %arg1: i32) -> (i32, i32) {
    %c0_i32 = arith.constant 0 : i32
    %c0_i32_0 = arith.constant 0 : i32
    return %arg1, %c0_i32 : i32, i32
  }
  func.func @transform_3(%arg0: i32, %arg1: i32) -> (i32, i32) {
    %c0_i32 = arith.constant 0 : i32
    %c0_i32_0 = arith.constant 0 : i32
    return %c0_i32, %arg1 : i32, i32
  }
  func.func @transform_4(%arg0: i32, %arg1: i32) -> (i32, i32) {
    %c0_i32 = arith.constant 0 : i32
    %c0_i32_0 = arith.constant 0 : i32
    return %arg0, %c0_i32 : i32, i32
  }
}

</mosaic_0001>

<llo_original>
// kernel: contrastive_loss.1
$region0: #{contrastive_loss.1}
  #allocation0 [shape = 'u32[]', space=smem, size = 0x4, offset = 0x4, fixed_abs, tag = 'smem constant byte address 0x4 - core index']
  #allocation1 [shape = 'u32[72,128]{1,0:T(1,128)}', space=vmem, size = 0x9000, scoped, tag = 'internal scratch']
  #allocation2 [shape = 'f32[8,64]{1,0:T(8,128)}', space=vmem, size = 0x1000, scoped, tag = 'scratch operand']
  #allocation3 [shape = 'f32[8,1]{1,0:T(8,128)}', space=vmem, size = 0x1000, scoped, tag = 'scratch operand']
  #allocation4 [shape = 'f32[8,1]{1,0:T(8,128)}', space=vmem, size = 0x1000, scoped, tag = 'scratch operand']
  #allocation5 [shape = 'f32[8,1]{1,0:T(8,128)}', space=vmem, size = 0x1000, scoped, tag = 'scratch operand']
  #allocation6 [shape = 'f32[1]{0:T(128)S(6)}', space=smem, size = 0x200, scoped, tag = 'scoped memory for contrastive_loss.1']
  %s0 = inlined_call_operand.<no memory space> [shape: f32[1], index: 0, kind: input, shape index: {}]
  %s1 = inlined_call_operand.vmem [shape: f32[16,64], index: 1, kind: input, shape index: {}]
  %s2 = inlined_call_operand.vmem [shape: f32[256,64], index: 2, kind: input, shape index: {}]
  %s3 = inlined_call_operand.vmem [shape: f32[1,256], index: 3, kind: input, shape index: {}]
  %s4 = inlined_call_operand.vmem [shape: f32[16,1], index: 4, kind: output, shape index: {}]
  %s5 = sld [smem:[#allocation0]]
  $region57: #{contrastive_loss.1} parent=0
    _
  %s7 = ssub.s32 1, %s5
  %s8 = scalar_select 0, %s7, %s5
  %9 = sst [smem:[#allocation6]] %s0
  loop: start=0, step=1, limit=6
  $region2: #{contrastive_loss.1} parent=0 // loop_pre_header
    _
  $region3: #{contrastive_loss.1} parent=0 // loop_header
    %s11 = sphi 0, %s15
    %p12 = scmp.ge.s32.totalorder %s11, 6
    %s18 = sphi 0, %s30
    %s19 = sphi 0, %s26
    %s20 = sphi 0, %s18
    %s21 = sphi 0, %s19
    %s22 = sphi 0, %s20
    %s23 = sphi 0, %s21
    %s31 = sphi 0, %s31
    %s33 = sphi 0, %s31
    %s34 = sphi 0, %s33
    %s48 = sphi 0, %s34
    %s54 = sphi 0, %s56
    %s57 = sphi 0, %s54
    %s58 = sphi 0, %s57
    %s74 = sphi 0, %s58
    %s80 = sphi 0, %s82
    %s83 = sphi 0, %s80
    %s84 = sphi 0, %s83
    %s100 = sphi 0, %s84
    %s106 = sphi 0, %s108
    %s109 = sphi 0, %s106
    %s110 = sphi 0, %s109
    %s126 = sphi 0, %s110
    %s132 = sphi 0, %s134
    %s135 = sphi 0, %s132
    %s136 = sphi 0, %s135
    %s152 = sphi 0, %s136
  $region4: #{contrastive_loss.1} parent=0 // loop_header_branch
    %14 = sbr.rel (%p12) target = $region8
  $region5: #{contrastive_loss.1} parent=0 // loop_body
    %s16 = ssub.s32 %s11, 1
    %s17 = ssub.s32 %s11, 2
    %s24 = sadd.s32 1, %s19
    %p25 = scmp.ge.s32.totalorder %s24, 2
    %s26 = scalar_select %p25, 0, %s24
    %s27 = sadd.s32 1, %s18
    %s28 = scalar_select %p25, %s27, %s18
    %p29 = scmp.ge.s32.totalorder %s28, 2
    %s30 = scalar_select %p29, 0, %s28
    %s32 = sadd.s32 %s31, 1
    %p35 = scmp.eq.s32.totalorder %s11, 3
    %p36 = scmp.ne.s32.totalorder %s31, %s33
    %p37 = scmp.eq.s32.totalorder %s11, 0
    %p38 = por %p36, %p37
    %p39 = scmp.ne.s32.totalorder %s31, %s33
    %p40 = scmp.eq.s32.totalorder %s16, 3
    %p41 = por %p39, %p40
    %p42 = scmp.ne.s32.totalorder %s33, %s34
    %p43 = scmp.eq.s32.totalorder %s16, 0
    %p44 = por %p42, %p43
    %p45 = scmp.ne.s32.totalorder %s33, %s34
    %p46 = scmp.eq.s32.totalorder %s17, 3
    %p47 = por %p45, %p46
    %p49 = scmp.ne.s32.totalorder %s34, %s48
    %p50 = scmp.eq.s32.totalorder %s17, 0
    %p51 = por %p49, %p50
    %s52 = ssub.s32 %s18, %s30
    %p53 = scmp.eq.s32.totalorder %s52, 0
    %s55 = sadd.s32 %s54, 1
    %s56 = scalar_select %p53, %s54, %s55
    %p59 = pneg %p53
    %p60 = scmp.eq.s32.totalorder %s11, 3
    %p61 = por %p59, %p60
    %p62 = scmp.ne.s32.totalorder %s54, %s57
    %p63 = scmp.eq.s32.totalorder %s11, 0
    %p64 = por %p62, %p63
    %p65 = scmp.ne.s32.totalorder %s54, %s57
    %p66 = scmp.eq.s32.totalorder %s16, 3
    %p67 = por %p65, %p66
    %p68 = scmp.ne.s32.totalorder %s57, %s58
    %p69 = scmp.eq.s32.totalorder %s16, 0
    %p70 = por %p68, %p69
    %p71 = scmp.ne.s32.totalorder %s57, %s58
    %p72 = scmp.eq.s32.totalorder %s17, 3
    %p73 = por %p71, %p72
    %p75 = scmp.ne.s32.totalorder %s58, %s74
    %p76 = scmp.eq.s32.totalorder %s17, 0
    %p77 = por %p75, %p76
    %s78 = ssub.s32 %s19, %s26
    %p79 = scmp.eq.s32.totalorder %s78, 0
    %s81 = sadd.s32 %s80, 1
    %s82 = scalar_select %p79, %s80, %s81
    %p85 = pneg %p79
    %p86 = scmp.eq.s32.totalorder %s11, 3
    %p87 = por %p85, %p86
    %p88 = scmp.ne.s32.totalorder %s80, %s83
    %p89 = scmp.eq.s32.totalorder %s11, 0
    %p90 = por %p88, %p89
    %p91 = scmp.ne.s32.totalorder %s80, %s83
    %p92 = scmp.eq.s32.totalorder %s16, 3
    %p93 = por %p91, %p92
    %p94 = scmp.ne.s32.totalorder %s83, %s84
    %p95 = scmp.eq.s32.totalorder %s16, 0
    %p96 = por %p94, %p95
    %p97 = scmp.ne.s32.totalorder %s83, %s84
    %p98 = scmp.eq.s32.totalorder %s17, 3
    %p99 = por %p97, %p98
    %p101 = scmp.ne.s32.totalorder %s84, %s100
    %p102 = scmp.eq.s32.totalorder %s17, 0
    %p103 = por %p101, %p102
    %s104 = ssub.s32 %s19, %s26
    %p105 = scmp.eq.s32.totalorder %s104, 0
    %s107 = sadd.s32 %s106, 1
    %s108 = scalar_select %p105, %s106, %s107
    %p111 = pneg %p105
    %p112 = scmp.eq.s32.totalorder %s11, 3
    %p113 = por %p111, %p112
    %p114 = scmp.ne.s32.totalorder %s106, %s109
    %p115 = scmp.eq.s32.totalorder %s11, 0
    %p116 = por %p114, %p115
    %p117 = scmp.ne.s32.totalorder %s106, %s109
    %p118 = scmp.eq.s32.totalorder %s16, 3
    %p119 = por %p117, %p118
    %p120 = scmp.ne.s32.totalorder %s109, %s110
    %p121 = scmp.eq.s32.totalorder %s16, 0
    %p122 = por %p120, %p121
    %p123 = scmp.ne.s32.totalorder %s109, %s110
    %p124 = scmp.eq.s32.totalorder %s17, 3
    %p125 = por %p123, %p124
    %p127 = scmp.ne.s32.totalorder %s110, %s126
    %p128 = scmp.eq.s32.totalorder %s17, 0
    %p129 = por %p127, %p128
    %s130 = ssub.s32 %s18, %s30
    %p131 = scmp.eq.s32.totalorder %s130, 0
    %s133 = sadd.s32 %s132, 1
    %s134 = scalar_select %p131, %s132, %s133
    %p137 = pneg %p131
    %p138 = scmp.eq.s32.totalorder %s11, 3
    %p139 = por %p137, %p138
    %p140 = scmp.ne.s32.totalorder %s132, %s135
    %p141 = scmp.eq.s32.totalorder %s11, 0
    %p142 = por %p140, %p141
    %p143 = scmp.ne.s32.totalorder %s132, %s135
    %p144 = scmp.eq.s32.totalorder %s16, 3
    %p145 = por %p143, %p144
    %p146 = scmp.ne.s32.totalorder %s135, %s136
    %p147 = scmp.eq.s32.totalorder %s16, 0
    %p148 = por %p146, %p147
    %p149 = scmp.ne.s32.totalorder %s135, %s136
    %p150 = scmp.eq.s32.totalorder %s17, 3
    %p151 = por %p149, %p150
    %p153 = scmp.ne.s32.totalorder %s136, %s152
    %p154 = scmp.eq.s32.totalorder %s17, 0
    %p155 = por %p153, %p154
    %p156 = scmp.le.s32.totalorder 1, %s11
    %p157 = scmp.lt.s32.totalorder %s11, 5
    %p158 = pnand %p156, %p157
    %p159 = pneg %p158
    // Predicated region
    $region9: #{contrastive_loss.1} parent=5 // pred_check
      _
    $region10: #{contrastive_loss.1} parent=5 // pred_check_branch
      %161 = sbr.rel (%p158) target = $region12
    $region11: #{contrastive_loss.1} parent=5 // pred_region
      %s162 = ssub.s32 %s11, 1
      // Predicated region
      $region13: #{contrastive_loss.1} parent=11 // pred_check
        %p163 = pneg %p44
      $region14: #{contrastive_loss.1} parent=11 // pred_check_branch
        %165 = sbr.rel (%p163) target = $region16
      $region15: #{contrastive_loss.1} parent=11 // pred_region
        _
      $region16: #{contrastive_loss.1} parent=11 // pred_fallthru
        _
    $region12: #{contrastive_loss.1} parent=5 // pred_fallthru
      _
    %p166 = scmp.lt.s32.totalorder %s11, 4
    // Predicated region
    $region17: #{contrastive_loss.1} parent=5 // pred_check
      %p167 = pneg %p166
    $region18: #{contrastive_loss.1} parent=5 // pred_check_branch
      %169 = sbr.rel (%p167) target = $region20
    $region19: #{contrastive_loss.1} parent=5 // pred_region
      // Predicated region
      $region21: #{contrastive_loss.1} parent=19 // pred_check
        %p170 = pneg %p64
      $region22: #{contrastive_loss.1} parent=19 // pred_check_branch
        %172 = sbr.rel (%p170) target = $region24
      $region23: #{contrastive_loss.1} parent=19 // pred_region
        %p173 = scmp.lt.s32.totalorder %s18, 1
        %s174 = scalar_select %p173, %s18, 1
        %s175 = smul.addr %s174, 8
        %s176 = scalar_lea.vmem %s1, %s175
      $region24: #{contrastive_loss.1} parent=19 // pred_fallthru
        _
      // Predicated region
      $region25: #{contrastive_loss.1} parent=19 // pred_check
        %p177 = pneg %p90
      $region26: #{contrastive_loss.1} parent=19 // pred_check_branch
        %179 = sbr.rel (%p177) target = $region28
      $region27: #{contrastive_loss.1} parent=19 // pred_region
        %s180 = smul.u32 16, %s19
        %p181 = scmp.lt.s32.totalorder %s180, 31
        %s182 = scalar_select %p181, %s180, 31
        %s183 = smul.addr %s182, 8
        %s184 = scalar_lea.vmem %s2, %s183
        %s185 = smul.u32 16, %s19
      $region28: #{contrastive_loss.1} parent=19 // pred_fallthru
        _
      // Predicated region
      $region29: #{contrastive_loss.1} parent=19 // pred_check
        %p186 = pneg %p116
      $region30: #{contrastive_loss.1} parent=19 // pred_check_branch
        %188 = sbr.rel (%p186) target = $region32
      $region31: #{contrastive_loss.1} parent=19 // pred_region
        %p189 = scmp.lt.s32.totalorder %s19, 1
        %s190 = scalar_select %p189, %s19, 1
        %s191 = scalar_lea.vmem %s3, %s190
      $region32: #{contrastive_loss.1} parent=19 // pred_fallthru
        _
    $region20: #{contrastive_loss.1} parent=5 // pred_fallthru
      _
    %p192 = scmp.le.s32.totalorder 1, %s11
    %p193 = scmp.lt.s32.totalorder %s11, 5
    %p194 = pnand %p192, %p193
    %p195 = pneg %p194
    // Predicated region
    $region33: #{contrastive_loss.1} parent=5 // pred_check
      _
    $region34: #{contrastive_loss.1} parent=5 // pred_check_branch
      %197 = sbr.rel (%p194) target = $region36
    $region35: #{contrastive_loss.1} parent=5 // pred_region
      %s198 = ssub.s32 %s11, 1
      %p199 = pneg %p44
      %p200 = pneg %p41
      %p201 = scmp.lt.s32.totalorder %s20, 1
      %s202 = scalar_select %p201, %s20, 1
      %s203 = smul.addr %s202, 8
      %s204 = scalar_lea.vmem %s1, %s203
      %p205 = pneg %p70
      %p206 = pneg %p67
      %s207 = smul.u32 16, %s21
      %p208 = scmp.lt.s32.totalorder %s207, 31
      %s209 = scalar_select %p208, %s207, 31
      %s210 = smul.addr %s209, 8
      %s211 = scalar_lea.vmem %s2, %s210
      %p212 = pneg %p96
      %p213 = pneg %p93
      %p214 = scmp.lt.s32.totalorder %s21, 1
      %s215 = scalar_select %p214, %s21, 1
      %s216 = scalar_lea.vmem %s3, %s215
      %p217 = pneg %p122
      %p218 = pneg %p119
      %p219 = pneg %p148
      %p220 = pneg %p145
      %p221 = scmp.lt.s32.totalorder %s20, 1
      %s222 = scalar_select %p221, %s20, 1
      %s223 = smul.addr %s222, 8
      %s224 = scalar_lea.vmem %s4, %s223
      %p225 = scmp.lt.s32.totalorder %s20, 1
      %s226 = scalar_select %p225, %s20, 1
      %s227 = smul.addr %s226, 8
      %s228 = scalar_lea.vmem %s1, %s227
      %s229 = smul.u32 16, %s21
      %p230 = scmp.lt.s32.totalorder %s229, 31
      %s231 = scalar_select %p230, %s229, 31
      %s232 = smul.addr %s231, 8
      %s233 = scalar_lea.vmem %s2, %s232
      %s234 = smul.u32 16, %s21
      %p235 = scmp.lt.s32.totalorder %s21, 1
      %s236 = scalar_select %p235, %s21, 1
      %s237 = scalar_lea.vmem %s3, %s236
      %p238 = scmp.lt.s32.totalorder %s20, 1
      %s239 = scalar_select %p238, %s20, 1
      %s240 = smul.addr %s239, 8
      %s241 = scalar_lea.vmem %s4, %s240
      %p242 = scmp.eq.s32.totalorder %s21, 0
      // Predicated region
      $region37: #{contrastive_loss.1} parent=35 // pred_check
        %p243 = pneg %p242
      $region38: #{contrastive_loss.1} parent=35 // pred_check_branch
        %245 = sbr.rel (%p243) target = $region40
      $region39: #{contrastive_loss.1} parent=35 // pred_region
        %s246 = sld [smem:[#allocation6]]
        %s247 = ssub.f32 0.0, %s246
        %v248 = vstv %s247
        %v249 = vmul.f32 %v248, 1.442695
        %v250 = vpow.pop %v249
        %s251 = vtos %v250
        %v252 = vld [vmem:[%s228] sm:$0xff]
        %v253 = vstv %s251
        %v254 = vmul.f32 %v252, %v253
        %vm255 = vcmask 523264
        %256 = vst.msk [vmem:[#allocation2] sm:$0xff] %vm255, %v254
        %v257 = vmul.f32 %v254, %v252
        %v258 = vsel %vm255, %v257, 0.0
        %259 = vadd.xlane.f32.xlu0 %v258
        %v260 = vpop.xlane.xlu0 %259
        %vm261 = vcmask 7168
        %262 = vst.msk [vmem:[#allocation3] sm:$0xff] %vm261, %v260
        %263 = vst.msk [vmem:[#allocation4] sm:$0xff] %vm261, -1e+30
        %264 = vst.msk [vmem:[#allocation5] sm:$0xff] %vm261, 0.0
      $region40: #{contrastive_loss.1} parent=35 // pred_fallthru
        _
      %v265 = vld [vmem:[#allocation2] sm:$0xff]
      %v266 = vld [vmem:[%s233] sm:$0xff]
      %v267 = vld [vmem:[%s233 + $0x8] sm:$0xff]
      %v268 = vld [vmem:[%s233 + $0x10] sm:$0xff]
      %v269 = vld [vmem:[%s233 + $0x18] sm:$0xff]
      %v270 = vld [vmem:[%s233 + $0x20] sm:$0xff]
      %v271 = vld [vmem:[%s233 + $0x28] sm:$0xff]
      %v272 = vld [vmem:[%s233 + $0x30] sm:$0xff]
      %v273 = vld [vmem:[%s233 + $0x38] sm:$0xff]
      %v274 = vld [vmem:[%s233 + $0x40] sm:$0xff]
      %v275 = vld [vmem:[%s233 + $0x48] sm:$0xff]
      %v276 = vld [vmem:[%s233 + $0x50] sm:$0xff]
      %v277 = vld [vmem:[%s233 + $0x58] sm:$0xff]
      %v278 = vld [vmem:[%s233 + $0x60] sm:$0xff]
      %v279 = vld [vmem:[%s233 + $0x68] sm:$0xff]
      %v280 = vld [vmem:[%s233 + $0x70] sm:$0xff]
      %v281 = vld [vmem:[%s233 + $0x78] sm:$0xff]
      %v282 = vld [vmem:[%s237] sm:$0x1]
      %v284 = vperm.slane %v282, 0
      %vm286 = vcmask 523264
      %v288 = vsel %vm286, %v265, 0
      %v291 = vsel %vm286, %v266, 0
      %v294 = vsel %vm286, %v267, 0
      %v297 = vsel %vm286, %v268, 0
      %v300 = vsel %vm286, %v269, 0
      %v303 = vsel %vm286, %v270, 0
      %v306 = vsel %vm286, %v271, 0
      %v309 = vsel %vm286, %v272, 0
      %v312 = vsel %vm286, %v273, 0
      %v315 = vsel %vm286, %v274, 0
      %v318 = vsel %vm286, %v275, 0
      %v321 = vsel %vm286, %v276, 0
      %v324 = vsel %vm286, %v277, 0
      %v327 = vsel %vm286, %v278, 0
      %v330 = vsel %vm286, %v279, 0
      %v333 = vsel %vm286, %v280, 0
      %v336 = vsel %vm286, %v281, 0
      %v338 = vand.u32 %v336, 4294901760
      %339 = vmatpush.xpose.msra.mxu0 %v338
      %v340 = vand.u32 %v333, 4294901760
      %341 = vmatpush.xpose.msra.mxu0 %v340
      %v342 = vand.u32 %v330, 4294901760
      %343 = vmatpush.xpose.msra.mxu0 %v342
      %v344 = vand.u32 %v327, 4294901760
      %345 = vmatpush.xpose.msra.mxu0 %v344
      %v346 = vand.u32 %v324, 4294901760
      %347 = vmatpush.xpose.msra.mxu0 %v346
      %v348 = vand.u32 %v321, 4294901760
      %349 = vmatpush.xpose.msra.mxu0 %v348
      %v350 = vand.u32 %v318, 4294901760
      %351 = vmatpush.xpose.msra.mxu0 %v350
      %v352 = vand.u32 %v315, 4294901760
      %353 = vmatpush.xpose.msra.mxu0 %v352
      %v354 = vand.u32 %v312, 4294901760
      %355 = vmatpush.xpose.msra.mxu0 %v354
      %v356 = vand.u32 %v309, 4294901760
      %357 = vmatpush.xpose.msra.mxu0 %v356
      %v358 = vand.u32 %v306, 4294901760
      %359 = vmatpush.xpose.msra.mxu0 %v358
      %v360 = vand.u32 %v303, 4294901760
      %361 = vmatpush.xpose.msra.mxu0 %v360
      %v362 = vand.u32 %v300, 4294901760
      %363 = vmatpush.xpose.msra.mxu0 %v362
      %v364 = vand.u32 %v297, 4294901760
      %365 = vmatpush.xpose.msra.mxu0 %v364
      %v366 = vand.u32 %v294, 4294901760
      %367 = vmatpush.xpose.msra.mxu0 %v366
      %v368 = vand.u32 %v291, 4294901760
      %369 = vmatpush.xpose.msra.mxu0 %v368
      %v370 = vand.u32 %v288, 4294901760
      %v371 = vsub.f32 %v288, %v370
      %v372 = vand.u32 %v371, 4294901760
      %v373 = vsub.f32 %v371, %v372
      %v374 = vand.u32 %v373, 4294901760
      %375 = vmatmul.f32.gmra.mxu0 %v374
      %v376 = vpop.f32.mrf.mxu0
      %v377 = vadd.f32 %v284, %v376
      %378 = vdwg.mxu0
      %v379 = vand.u32 %v336, 4294901760
      %v380 = vsub.f32 %v336, %v379
      %v381 = vand.u32 %v380, 4294901760
      %v382 = vsub.f32 %v380, %v381
      %v383 = vand.u32 %v382, 4294901760
      %384 = vmatpush.xpose.msra.mxu0 %v383
      %v385 = vand.u32 %v333, 4294901760
      %v386 = vsub.f32 %v333, %v385
      %v387 = vand.u32 %v386, 4294901760
      %v388 = vsub.f32 %v386, %v387
      %v389 = vand.u32 %v388, 4294901760
      %390 = vmatpush.xpose.msra.mxu0 %v389
      %v391 = vand.u32 %v330, 4294901760
      %v392 = vsub.f32 %v330, %v391
      %v393 = vand.u32 %v392, 4294901760
      %v394 = vsub.f32 %v392, %v393
      %v395 = vand.u32 %v394, 4294901760
      %396 = vmatpush.xpose.msra.mxu0 %v395
      %v397 = vand.u32 %v327, 4294901760
      %v398 = vsub.f32 %v327, %v397
      %v399 = vand.u32 %v398, 4294901760
      %v400 = vsub.f32 %v398, %v399
      %v401 = vand.u32 %v400, 4294901760
      %402 = vmatpush.xpose.msra.mxu0 %v401
      %v403 = vand.u32 %v324, 4294901760
      %v404 = vsub.f32 %v324, %v403
      %v405 = vand.u32 %v404, 4294901760
      %v406 = vsub.f32 %v404, %v405
      %v407 = vand.u32 %v406, 4294901760
      %408 = vmatpush.xpose.msra.mxu0 %v407
      %v409 = vand.u32 %v321, 4294901760
      %v410 = vsub.f32 %v321, %v409
      %v411 = vand.u32 %v410, 4294901760
      %v412 = vsub.f32 %v410, %v411
      %v413 = vand.u32 %v412, 4294901760
      %414 = vmatpush.xpose.msra.mxu0 %v413
      %v415 = vand.u32 %v318, 4294901760
      %v416 = vsub.f32 %v318, %v415
      %v417 = vand.u32 %v416, 4294901760
      %v418 = vsub.f32 %v416, %v417
      %v419 = vand.u32 %v418, 4294901760
      %420 = vmatpush.xpose.msra.mxu0 %v419
      %v421 = vand.u32 %v315, 4294901760
      %v422 = vsub.f32 %v315, %v421
      %v423 = vand.u32 %v422, 4294901760
      %v424 = vsub.f32 %v422, %v423
      %v425 = vand.u32 %v424, 4294901760
      %426 = vmatpush.xpose.msra.mxu0 %v425
      %v427 = vand.u32 %v312, 4294901760
      %v428 = vsub.f32 %v312, %v427
      %v429 = vand.u32 %v428, 4294901760
      %v430 = vsub.f32 %v428, %v429
      %v431 = vand.u32 %v430, 4294901760
      %432 = vmatpush.xpose.msra.mxu0 %v431
      %v433 = vand.u32 %v309, 4294901760
      %v434 = vsub.f32 %v309, %v433
      %v435 = vand.u32 %v434, 4294901760
      %v436 = vsub.f32 %v434, %v435
      %v437 = vand.u32 %v436, 4294901760
      %438 = vmatpush.xpose.msra.mxu0 %v437
      %v439 = vand.u32 %v306, 4294901760
      %v440 = vsub.f32 %v306, %v439
      %v441 = vand.u32 %v440, 4294901760
      %v442 = vsub.f32 %v440, %v441
      %v443 = vand.u32 %v442, 4294901760
      %444 = vmatpush.xpose.msra.mxu0 %v443
      %v445 = vand.u32 %v303, 4294901760
      %v446 = vsub.f32 %v303, %v445
      %v447 = vand.u32 %v446, 4294901760
      %v448 = vsub.f32 %v446, %v447
      %v449 = vand.u32 %v448, 4294901760
      %450 = vmatpush.xpose.msra.mxu0 %v449
      %v451 = vand.u32 %v300, 4294901760
      %v452 = vsub.f32 %v300, %v451
      %v453 = vand.u32 %v452, 4294901760
      %v454 = vsub.f32 %v452, %v453
      %v455 = vand.u32 %v454, 4294901760
      %456 = vmatpush.xpose.msra.mxu0 %v455
      %v457 = vand.u32 %v297, 4294901760
      %v458 = vsub.f32 %v297, %v457
      %v459 = vand.u32 %v458, 4294901760
      %v460 = vsub.f32 %v458, %v459
      %v461 = vand.u32 %v460, 4294901760
      %462 = vmatpush.xpose.msra.mxu0 %v461
      %v463 = vand.u32 %v294, 4294901760
      %v464 = vsub.f32 %v294, %v463
      %v465 = vand.u32 %v464, 4294901760
      %v466 = vsub.f32 %v464, %v465
      %v467 = vand.u32 %v466, 4294901760
      %468 = vmatpush.xpose.msra.mxu0 %v467
      %v469 = vand.u32 %v291, 4294901760
      %v470 = vsub.f32 %v291, %v469
      %v471 = vand.u32 %v470, 4294901760
      %v472 = vsub.f32 %v470, %v471
      %v473 = vand.u32 %v472, 4294901760
      %474 = vmatpush.xpose.msra.mxu0 %v473
      %v475 = vand.u32 %v288, 4294901760
      %476 = vmatmul.f32.gmra.mxu0 %v475
      %v477 = vpop.f32.mrf.mxu0
      %v478 = vadd.f32 %v377, %v477
      %479 = vdwg.mxu0
      %v480 = vand.u32 %v336, 4294901760
      %v481 = vsub.f32 %v336, %v480
      %482 = vmatpush.xpose.msra.mxu0 %v481
      %v483 = vand.u32 %v333, 4294901760
      %v484 = vsub.f32 %v333, %v483
      %485 = vmatpush.xpose.msra.mxu0 %v484
      %v486 = vand.u32 %v330, 4294901760
      %v487 = vsub.f32 %v330, %v486
      %488 = vmatpush.xpose.msra.mxu0 %v487
      %v489 = vand.u32 %v327, 4294901760
      %v490 = vsub.f32 %v327, %v489
      %491 = vmatpush.xpose.msra.mxu0 %v490
      %v492 = vand.u32 %v324, 4294901760
      %v493 = vsub.f32 %v324, %v492
      %494 = vmatpush.xpose.msra.mxu0 %v493
      %v495 = vand.u32 %v321, 4294901760
      %v496 = vsub.f32 %v321, %v495
      %497 = vmatpush.xpose.msra.mxu0 %v496
      %v498 = vand.u32 %v318, 4294901760
      %v499 = vsub.f32 %v318, %v498
      %500 = vmatpush.xpose.msra.mxu0 %v499
      %v501 = vand.u32 %v315, 4294901760
      %v502 = vsub.f32 %v315, %v501
      %503 = vmatpush.xpose.msra.mxu0 %v502
      %v504 = vand.u32 %v312, 4294901760
      %v505 = vsub.f32 %v312, %v504
      %506 = vmatpush.xpose.msra.mxu0 %v505
      %v507 = vand.u32 %v309, 4294901760
      %v508 = vsub.f32 %v309, %v507
      %509 = vmatpush.xpose.msra.mxu0 %v508
      %v510 = vand.u32 %v306, 4294901760
      %v511 = vsub.f32 %v306, %v510
      %512 = vmatpush.xpose.msra.mxu0 %v511
      %v513 = vand.u32 %v303, 4294901760
      %v514 = vsub.f32 %v303, %v513
      %515 = vmatpush.xpose.msra.mxu0 %v514
      %v516 = vand.u32 %v300, 4294901760
      %v517 = vsub.f32 %v300, %v516
      %518 = vmatpush.xpose.msra.mxu0 %v517
      %v519 = vand.u32 %v297, 4294901760
      %v520 = vsub.f32 %v297, %v519
      %521 = vmatpush.xpose.msra.mxu0 %v520
      %v522 = vand.u32 %v294, 4294901760
      %v523 = vsub.f32 %v294, %v522
      %524 = vmatpush.xpose.msra.mxu0 %v523
      %v525 = vand.u32 %v291, 4294901760
      %v526 = vsub.f32 %v291, %v525
      %527 = vmatpush.xpose.msra.mxu0 %v526
      %v528 = vand.u32 %v288, 4294901760
      %v529 = vsub.f32 %v288, %v528
      %530 = vmatmul.f32.gmra.mxu0 %v529
      %v531 = vpop.f32.mrf.mxu0
      %v532 = vadd.f32 %v478, %v531
      %533 = vdwg.mxu0
      %v534 = vand.u32 %v336, 4294901760
      %535 = vmatpush.xpose.msra.mxu0 %v534
      %v536 = vand.u32 %v333, 4294901760
      %537 = vmatpush.xpose.msra.mxu0 %v536
      %v538 = vand.u32 %v330, 4294901760
      %539 = vmatpush.xpose.msra.mxu0 %v538
      %v540 = vand.u32 %v327, 4294901760
      %541 = vmatpush.xpose.msra.mxu0 %v540
      %v542 = vand.u32 %v324, 4294901760
      %543 = vmatpush.xpose.msra.mxu0 %v542
      %v544 = vand.u32 %v321, 4294901760
      %545 = vmatpush.xpose.msra.mxu0 %v544
      %v546 = vand.u32 %v318, 4294901760
      %547 = vmatpush.xpose.msra.mxu0 %v546
      %v548 = vand.u32 %v315, 4294901760
      %549 = vmatpush.xpose.msra.mxu0 %v548
      %v550 = vand.u32 %v312, 4294901760
      %551 = vmatpush.xpose.msra.mxu0 %v550
      %v552 = vand.u32 %v309, 4294901760
      %553 = vmatpush.xpose.msra.mxu0 %v552
      %v554 = vand.u32 %v306, 4294901760
      %555 = vmatpush.xpose.msra.mxu0 %v554
      %v556 = vand.u32 %v303, 4294901760
      %557 = vmatpush.xpose.msra.mxu0 %v556
      %v558 = vand.u32 %v300, 4294901760
      %559 = vmatpush.xpose.msra.mxu0 %v558
      %v560 = vand.u32 %v297, 4294901760
      %561 = vmatpush.xpose.msra.mxu0 %v560
      %v562 = vand.u32 %v294, 4294901760
      %563 = vmatpush.xpose.msra.mxu0 %v562
      %v564 = vand.u32 %v291, 4294901760
      %565 = vmatpush.xpose.msra.mxu0 %v564
      %v566 = vand.u32 %v288, 4294901760
      %v567 = vsub.f32 %v288, %v566
      %v568 = vand.u32 %v567, 4294901760
      %569 = vmatmul.f32.gmra.mxu0 %v568
      %v570 = vpop.f32.mrf.mxu0
      %v571 = vadd.f32 %v532, %v570
      %572 = vdwg.mxu0
      %v573 = vand.u32 %v336, 4294901760
      %v574 = vsub.f32 %v336, %v573
      %v575 = vand.u32 %v574, 4294901760
      %576 = vmatpush.xpose.msra.mxu0 %v575
      %v577 = vand.u32 %v333, 4294901760
      %v578 = vsub.f32 %v333, %v577
      %v579 = vand.u32 %v578, 4294901760
      %580 = vmatpush.xpose.msra.mxu0 %v579
      %v581 = vand.u32 %v330, 4294901760
      %v582 = vsub.f32 %v330, %v581
      %v583 = vand.u32 %v582, 4294901760
      %584 = vmatpush.xpose.msra.mxu0 %v583
      %v585 = vand.u32 %v327, 4294901760
      %v586 = vsub.f32 %v327, %v585
      %v587 = vand.u32 %v586, 4294901760
      %588 = vmatpush.xpose.msra.mxu0 %v587
      %v589 = vand.u32 %v324, 4294901760
      %v590 = vsub.f32 %v324, %v589
      %v591 = vand.u32 %v590, 4294901760
      %592 = vmatpush.xpose.msra.mxu0 %v591
      %v593 = vand.u32 %v321, 4294901760
      %v594 = vsub.f32 %v321, %v593
      %v595 = vand.u32 %v594, 4294901760
      %596 = vmatpush.xpose.msra.mxu0 %v595
      %v597 = vand.u32 %v318, 4294901760
      %v598 = vsub.f32 %v318, %v597
      %v599 = vand.u32 %v598, 4294901760
      %600 = vmatpush.xpose.msra.mxu0 %v599
      %v601 = vand.u32 %v315, 4294901760
      %v602 = vsub.f32 %v315, %v601
      %v603 = vand.u32 %v602, 4294901760
      %604 = vmatpush.xpose.msra.mxu0 %v603
      %v605 = vand.u32 %v312, 4294901760
      %v606 = vsub.f32 %v312, %v605
      %v607 = vand.u32 %v606, 4294901760
      %608 = vmatpush.xpose.msra.mxu0 %v607
      %v609 = vand.u32 %v309, 4294901760
      %v610 = vsub.f32 %v309, %v609
      %v611 = vand.u32 %v610, 4294901760
      %612 = vmatpush.xpose.msra.mxu0 %v611
      %v613 = vand.u32 %v306, 4294901760
      %v614 = vsub.f32 %v306, %v613
      %v615 = vand.u32 %v614, 4294901760
      %616 = vmatpush.xpose.msra.mxu0 %v615
      %v617 = vand.u32 %v303, 4294901760
      %v618 = vsub.f32 %v303, %v617
      %v619 = vand.u32 %v618, 4294901760
      %620 = vmatpush.xpose.msra.mxu0 %v619
      %v621 = vand.u32 %v300, 4294901760
      %v622 = vsub.f32 %v300, %v621
      %v623 = vand.u32 %v622, 4294901760
      %624 = vmatpush.xpose.msra.mxu0 %v623
      %v625 = vand.u32 %v297, 4294901760
      %v626 = vsub.f32 %v297, %v625
      %v627 = vand.u32 %v626, 4294901760
      %628 = vmatpush.xpose.msra.mxu0 %v627
      %v629 = vand.u32 %v294, 4294901760
      %v630 = vsub.f32 %v294, %v629
      %v631 = vand.u32 %v630, 4294901760
      %632 = vmatpush.xpose.msra.mxu0 %v631
      %v633 = vand.u32 %v291, 4294901760
      %v634 = vsub.f32 %v291, %v633
      %v635 = vand.u32 %v634, 4294901760
      %636 = vmatpush.xpose.msra.mxu0 %v635
      %v637 = vand.u32 %v288, 4294901760
      %638 = vmatmul.f32.gmra.mxu0 %v637
      %v639 = vpop.f32.mrf.mxu0
      %v640 = vadd.f32 %v571, %v639
      %641 = vdwg.mxu0
      %v642 = vand.u32 %v336, 4294901760
      %643 = vmatpush.xpose.msra.mxu0 %v642
      %v644 = vand.u32 %v333, 4294901760
      %645 = vmatpush.xpose.msra.mxu0 %v644
      %v646 = vand.u32 %v330, 4294901760
      %647 = vmatpush.xpose.msra.mxu0 %v646
      %v648 = vand.u32 %v327, 4294901760
      %649 = vmatpush.xpose.msra.mxu0 %v648
      %v650 = vand.u32 %v324, 4294901760
      %651 = vmatpush.xpose.msra.mxu0 %v650
      %v652 = vand.u32 %v321, 4294901760
      %653 = vmatpush.xpose.msra.mxu0 %v652
      %v654 = vand.u32 %v318, 4294901760
      %655 = vmatpush.xpose.msra.mxu0 %v654
      %v656 = vand.u32 %v315, 4294901760
      %657 = vmatpush.xpose.msra.mxu0 %v656
      %v658 = vand.u32 %v312, 4294901760
      %659 = vmatpush.xpose.msra.mxu0 %v658
      %v660 = vand.u32 %v309, 4294901760
      %661 = vmatpush.xpose.msra.mxu0 %v660
      %v662 = vand.u32 %v306, 4294901760
      %663 = vmatpush.xpose.msra.mxu0 %v662
      %v664 = vand.u32 %v303, 4294901760
      %665 = vmatpush.xpose.msra.mxu0 %v664
      %v666 = vand.u32 %v300, 4294901760
      %667 = vmatpush.xpose.msra.mxu0 %v666
      %v668 = vand.u32 %v297, 4294901760
      %669 = vmatpush.xpose.msra.mxu0 %v668
      %v670 = vand.u32 %v294, 4294901760
      %671 = vmatpush.xpose.msra.mxu0 %v670
      %v672 = vand.u32 %v291, 4294901760
      %673 = vmatpush.xpose.msra.mxu0 %v672
      %v674 = vand.u32 %v288, 4294901760
      %675 = vmatmul.f32.gmra.mxu0 %v674
      %v676 = vpop.f32.mrf.mxu0
      %v677 = vadd.f32 %v640, %v676
      %678 = vdwg.mxu0
      %v679 = vld [vmem:[#allocation4] sm:$0xff]
      %680 = vmax.xlane.f32.xlu0 %v677
      %v681 = vpop.xlane.xlu0 %680
      %v682 = vmax.f32 %v679, %v681
      %v683 = vsub.f32 %v679, %v682
      %v684 = vmul.f32 %v683, 1.442695
      %v685 = vpow.pop %v684
      %v686 = vld [vmem:[#allocation5] sm:$0xff]
      %v687 = vmul.f32 %v685, %v686
      %689 = vset.pattern.permute.xlu0 0
      %690 = vperm.xlu0 %689, %v682
      %v691 = vpop.permute.xlu0 %690
      %v693 = vsub.f32 %v677, %v691
      %v694 = vmul.f32 %v693, 1.442695
      %v695 = vpow.pop %v694
      %696 = vadd.xlane.f32.xlu0 %v695
      %v697 = vpop.xlane.xlu0 %696
      %v698 = vadd.f32 %v687, %v697
      %vm699 = vcmask 7168
      %700 = vst.msk [vmem:[#allocation5] sm:$0xff] %vm699, %v698
      %701 = vst.msk [vmem:[#allocation4] sm:$0xff] %vm699, %v682
      %p702 = scmp.eq.s32.totalorder %s21, 1
      // Predicated region
      $region41: #{contrastive_loss.1} parent=35 // pred_check
        %p703 = pneg %p702
      $region42: #{contrastive_loss.1} parent=35 // pred_check_branch
        %705 = sbr.rel (%p703) target = $region44
      $region43: #{contrastive_loss.1} parent=35 // pred_region
        %v706 = vld [vmem:[#allocation4] sm:$0xff]
        %v707 = vld [vmem:[#allocation5] sm:$0xff]
        %v708 = vlog2.pop %v707
        %v709 = vmul.f32 %v708, 0.6931472
        %v710 = vadd.f32 %v706, %v709
        %v711 = vld [vmem:[#allocation3] sm:$0xff]
        %v712 = vsub.f32 %v710, %v711
        %713 = vst.msk [vmem:[%s241] sm:$0xff] %vm699, %v712
      $region44: #{contrastive_loss.1} parent=35 // pred_fallthru
        _
      %p714 = scmp.lt.s32.totalorder %s20, 1
      %s715 = scalar_select %p714, %s20, 1
      %s716 = smul.addr %s715, 8
      %s717 = scalar_lea.vmem %s4, %s716
      // Predicated region
      $region45: #{contrastive_loss.1} parent=35 // pred_check
        %p718 = pneg %p145
      $region46: #{contrastive_loss.1} parent=35 // pred_check_branch
        %720 = sbr.rel (%p718) target = $region48
      $region47: #{contrastive_loss.1} parent=35 // pred_region
        _
      $region48: #{contrastive_loss.1} parent=35 // pred_fallthru
        _
    $region36: #{contrastive_loss.1} parent=5 // pred_fallthru
      _
    %p721 = scmp.le.s32.totalorder 2, %s11
    // Predicated region
    $region49: #{contrastive_loss.1} parent=5 // pred_check
      %p722 = pneg %p721
    $region50: #{contrastive_loss.1} parent=5 // pred_check_branch
      %724 = sbr.rel (%p722) target = $region52
    $region51: #{contrastive_loss.1} parent=5 // pred_region
      %s725 = ssub.s32 %s11, 2
      // Predicated region
      $region53: #{contrastive_loss.1} parent=51 // pred_check
        %p726 = pneg %p151
      $region54: #{contrastive_loss.1} parent=51 // pred_check_branch
        %728 = sbr.rel (%p726) target = $region56
      $region55: #{contrastive_loss.1} parent=51 // pred_region
        %p729 = scmp.lt.s32.totalorder %s22, 1
        %s730 = scalar_select %p729, %s22, 1
        %s731 = smul.addr %s730, 8
        %s732 = scalar_lea.vmem %s4, %s731
      $region56: #{contrastive_loss.1} parent=51 // pred_fallthru
        _
    $region52: #{contrastive_loss.1} parent=5 // pred_fallthru
      _
  $region6: #{contrastive_loss.1} parent=0 // loop_footer
    %s15 = sadd.s32 1, %s11
  $region7: #{contrastive_loss.1} parent=0 // loop_footer_branch
    %10 = sbr.rel target = $region3
  $region8: #{contrastive_loss.1} parent=0 // loop_exit
    _

</llo_original>
